<compile_context>
chip_gen: v7x
topology: tpu7x:2x2x1
jax: 0.10.0
libtpu: 0.0.40
codegen_flags: <defaults>
</compile_context>

<pallas_src>
import math

import jax
import jax.numpy as jnp
import numpy as np
from jax.experimental import pallas as pl
from jax.experimental.pallas import tpu as pltpu

EPS_BN = 1e-5


# --------------------------------------------------------------------------
# Kernel
# --------------------------------------------------------------------------
def _ffn_kernel(x_ref, bn_scale_ref, bn_shift_ref, w1t_ref, b1_ref, w2t_ref,
                tail_ref, o_ref, acc_ref):
    """One (row-block, H-tile) step of the fused FFN.

    x_ref:        (TR, D)  bf16  flattened (batch*channel) rows
    bn_scale_ref: (TR, 1)  f32   gamma * rsqrt(var + eps), per row
    bn_shift_ref: (TR, 1)  f32   beta - mean * scale, per row
    w1t_ref:      (D, TH)  bf16  lr1 weight tile, pre-transposed
    b1_ref:       (1, TH)  f32
    w2t_ref:      (TH, D)  bf16  lr2 weight tile, pre-transposed
    tail_ref:     (2, D)   f32   row 0 = colsum(w2^T), row 1 = b2
    o_ref:        (TR, D)  f32
    acc_ref:      (TR, D)  f32   VMEM scratch (accumulator over H tiles)
    """
    h_idx = pl.program_id(1)

    @pl.when(h_idx == 0)
    def _():
        acc_ref[...] = jnp.zeros_like(acc_ref)

    # Linear1 tile (bf16 MXU, f32 accumulate) + bias + ReLU + folded BN scale.
    h = jnp.dot(x_ref[...], w1t_ref[...], preferred_element_type=jnp.float32)
    h = jnp.maximum(h + b1_ref[...], 0.0) * bn_scale_ref[...]

    # Linear2 partial product over this H tile, accumulated in f32.
    acc_ref[...] += jnp.dot(h.astype(w2t_ref.dtype), w2t_ref[...],
                            preferred_element_type=jnp.float32)

    @pl.when(h_idx == pl.num_programs(1) - 1)
    def _():
        # Folded BN shift: (h*s + t) @ w2^T == (h*s) @ w2^T + t * colsum(w2^T)
        o_ref[...] = (acc_ref[...]
                      + bn_shift_ref[...] * tail_ref[0:1, :]   # shift * colsum(w2^T)
                      + tail_ref[1:2, :]                       # b2
                      ).astype(o_ref.dtype)


# --------------------------------------------------------------------------
# Tiling helpers
# --------------------------------------------------------------------------
def _round_up(x, m):
    return ((x + m - 1) // m) * m


def _choose_row_block(R):
    """MXU-aligned row tile; >= 2 row-blocks when R allows (v7x megacore)."""
    if R >= 512:
        return 256          # 2x256^2 MXU tile (v6e/v7x)
    if R >= 256:
        return 128
    if R <= 8:
        return 8
    return _round_up(pl.cdiv(R, 2), 8)   # 2 blocks, sublane-aligned


def _choose_h_block(H):
    """Hidden-dim tile: multiple of 128 lanes, >= 2 H-steps when possible."""
    if H <= 128 or H % 128 != 0:
        return H            # full-extent block (exempt from the (8,128) rule)
    nh = H // 128
    units = min(4, max(1, nh // 2))   # prefer ~512-wide tiles, keep >= 2 steps
    while nh % units != 0:
        units -= 1
    return units * 128


# --------------------------------------------------------------------------
# One-time parameter preparation (hoisted out of the per-call hot path)
# --------------------------------------------------------------------------
def prepare_ffn_params(params, batch, eps_bn=EPS_BN):
    C = params["bn_w"].shape[0]          # bn_size
    H, D = params["w1"].shape            # (forward_expansion*state, state)
    R = batch * C
    TR = _choose_row_block(R)
    TH = _choose_h_block(H)
    R_pad = _round_up(R, TR)

    w1t = jnp.transpose(params["w1"]).astype(jnp.bfloat16)        # (D, H)
    w2t_f32 = jnp.transpose(params["w2"]).astype(jnp.float32)     # (H, D)
    w2t = w2t_f32.astype(jnp.bfloat16)
    b1 = params["b1"].reshape(1, H).astype(jnp.float32)

    # BatchNorm1d (eval) folded: scale = gamma*rsqrt(var+eps); shift = beta - mean*scale.
    scale_c = (params["bn_w"] * jax.lax.rsqrt(params["bn_rv"] + eps_bn)).astype(jnp.float32)
    shift_c = (params["bn_b"] - params["bn_rm"] * scale_c).astype(jnp.float32)
    bn_scale = jnp.pad(jnp.tile(scale_c, (batch,)), (0, R_pad - R)).reshape(R_pad, 1)
    bn_shift = jnp.pad(jnp.tile(shift_c, (batch,)), (0, R_pad - R)).reshape(R_pad, 1)

    # colsum(w2^T) in f32 + b2, stacked into one lane-dense constant operand.
    w2_colsum = jnp.sum(w2t_f32, axis=0).reshape(1, D)
    b2 = params["b2"].reshape(1, D).astype(jnp.float32)
    tail = jnp.concatenate([w2_colsum, b2], axis=0)               # (2, D)

    return dict(w1t=w1t, b1=b1, w2t=w2t, tail=tail,
                bn_scale=bn_scale, bn_shift=bn_shift,
                C=C, D=D, H=H, TR=TR, TH=TH, R_pad=R_pad)


# --------------------------------------------------------------------------
# Forward
# --------------------------------------------------------------------------
def ffn_forward(x, prep):
    """x: (batch, bn_size, state). Returns (batch, bn_size, state) float32."""
    N, C, D = x.shape
    H, TR, TH, R_pad = prep["H"], prep["TR"], prep["TH"], prep["R_pad"]
    R = N * C

    x2 = x.reshape(R, D)
    if R_pad != R:
        x2 = jnp.pad(x2, ((0, R_pad - R), (0, 0)))
    x2 = x2.astype(jnp.bfloat16)          # bf16 MXU inputs; f32 accumulate in-kernel

    grid = (R_pad // TR, H // TH)
    row = lambda i, h: (i, 0)

    out = pl.pallas_call(
        _ffn_kernel,
        out_shape=jax.ShapeDtypeStruct((R_pad, D), jnp.float32),
        grid_spec=pltpu.PrefetchScalarGridSpec(
            num_scalar_prefetch=0,
            grid=grid,
            in_specs=[
                pl.BlockSpec((TR, D), row),                    # x rows (bf16)
                pl.BlockSpec((TR, 1), row),                    # folded BN scale
                pl.BlockSpec((TR, 1), row),                    # folded BN shift
                pl.BlockSpec((D, TH), lambda i, h: (0, h)),    # w1^T tile (bf16)
                pl.BlockSpec((1, TH), lambda i, h: (0, h)),    # b1 tile
                pl.BlockSpec((TH, D), lambda i, h: (h, 0)),    # w2^T tile (bf16)
                pl.BlockSpec((2, D), lambda i, h: (0, 0)),     # [colsum(w2^T); b2]
            ],
            out_specs=pl.BlockSpec((TR, D), row),
            scratch_shapes=[pltpu.VMEM((TR, D), jnp.float32)],
        ),
        compiler_params=pltpu.CompilerParams(
            dimension_semantics=("parallel", "arbitrary"),
            vmem_limit_bytes=48 * 1024 * 1024,
        ),
    )(x2, prep["bn_scale"], prep["bn_shift"],
      prep["w1t"], prep["b1"], prep["w2t"], prep["tail"])

    if R_pad != R:
        out = out[:R]
    return out.reshape(N, C, D)


def make_ffn(params, batch, eps_bn=EPS_BN):
    """Build a jitted forward with all parameter prep folded in (done once)."""
    prep = prepare_ffn_params(params, batch, eps_bn)
    return jax.jit(lambda x: ffn_forward(x, prep))


# --------------------------------------------------------------------------
# Reference / params / demo
# --------------------------------------------------------------------------
def init_params(key, state_size, forward_expansion, bn_size):
    """Deterministic synthetic params matching FFN(state_size, forward_expansion, bn_size)."""
    H = forward_expansion * state_size
    ks = jax.random.split(key, 8)
    bound1 = 1.0 / math.sqrt(state_size)
    bound2 = 1.0 / math.sqrt(H)
    return dict(
        w1=jax.random.uniform(ks[0], (H, state_size), jnp.float32, -bound1, bound1),
        b1=jax.random.uniform(ks[1], (H,), jnp.float32, -bound1, bound1),
        w2=jax.random.uniform(ks[2], (state_size, H), jnp.float32, -bound2, bound2),
        b2=jax.random.uniform(ks[3], (state_size,), jnp.float32, -bound2, bound2),
        bn_w=jax.random.uniform(ks[4], (bn_size,), jnp.float32, 0.5, 1.5),
        bn_b=jax.random.uniform(ks[5], (bn_size,), jnp.float32, -0.5, 0.5),
        bn_rm=jax.random.normal(ks[6], (bn_size,), jnp.float32) * 0.1,
        bn_rv=jax.random.uniform(ks[7], (bn_size,), jnp.float32, 0.5, 1.5),
    )


def ffn_reference(x, p, eps_bn=EPS_BN):
    """Plain-JAX f32 reference mirroring torch FFN.forward in eval mode."""
    h = x @ p["w1"].T + p["b1"]
    h = jnp.maximum(h, 0.0)
    rm = p["bn_rm"].reshape(1, -1, 1)
    rv = p["bn_rv"].reshape(1, -1, 1)
    g = p["bn_w"].reshape(1, -1, 1)
    b = p["bn_b"].reshape(1, -1, 1)
    h = (h - rm) / jnp.sqrt(rv + eps_bn) * g + b
    h = h @ p["w2"].T + p["b2"]
    return h   # Dropout is identity in eval mode


if __name__ == "__main__":
    # Small shapes consistent with the module: x is (batch, bn_size, state_size).
    N = 4       # batch
    C = 16      # bn_size (BatchNorm1d channels)
    D = 128     # state_size (lane-dense last dim)
    FE = 2      # forward_expansion -> H = 256 (exercises 2 H-tiles + accumulation)

    root = jax.random.PRNGKey(0)
    kx, kp = jax.random.split(root)
    x = jax.random.normal(kx, (N, C, D), jnp.float32)
    params = init_params(kp, D, FE, C)

    ffn = make_ffn(params, batch=N)
    out = ffn(x)
    jax.block_until_ready(out)

    out_ref = ffn_reference(x, params)
    # Tolerance reflects bf16 MXU inputs (f32 accumulation / BN math in-kernel).
    assert np.allclose(np.asarray(out), np.asarray(out_ref), rtol=5e-2, atol=5e-2), (
        float(np.max(np.abs(np.asarray(out) - np.asarray(out_ref)))))

    print("KERNEL_OK")
</pallas_src>

<mosaic_0001>
module attributes {stable_mosaic.version = 11 : i64} {
  func.func @_ffn_kernel(%arg0: i32, %arg1: i32, %arg2: memref<32x128xbf16, #tpu.memory_space<vmem>>, %arg3: memref<32x1xf32, #tpu.memory_space<vmem>>, %arg4: memref<32x1xf32, #tpu.memory_space<vmem>>, %arg5: memref<128x128xbf16, #tpu.memory_space<vmem>>, %arg6: memref<1x128xf32, #tpu.memory_space<vmem>>, %arg7: memref<128x128xbf16, #tpu.memory_space<vmem>>, %arg8: memref<2x128xf32, #tpu.memory_space<vmem>>, %arg9: memref<32x128xf32, #tpu.memory_space<vmem>>, %arg10: memref<32x128xf32, #tpu.memory_space<vmem>>) attributes {dimension_semantics = [#tpu.dimension_semantics<parallel>, #tpu.dimension_semantics<arbitrary>], iteration_bounds = array<i64: 2, 2>, scalar_prefetch = 0 : i64, scratch_operands = 1 : i64, tpu.core_type = #tpu.core_type<tc>, window_params = [{transform_indices = @transform_0, window_bounds = array<i64: 32, 128>}, {transform_indices = @transform_1, window_bounds = array<i64: 32, 1>}, {transform_indices = @transform_2, window_bounds = array<i64: 32, 1>}, {transform_indices = @transform_3, window_bounds = array<i64: 128, 128>}, {transform_indices = @transform_4, window_bounds = array<i64: 1, 128>}, {transform_indices = @transform_5, window_bounds = array<i64: 128, 128>}, {pipeline_mode = #tpu.pipeline_mode<synchronous>, transform_indices = @transform_6, window_bounds = array<i64: 2, 128>}, {transform_indices = @transform_7, window_bounds = array<i64: 32, 128>}]} {
    %c0_i32 = arith.constant 0 : i32
    %0 = arith.cmpi eq, %arg1, %c0_i32 : i32
    %1 = arith.extui %0 : i1 to i32
    %c0_i32_0 = arith.constant 0 : i32
    %2 = arith.cmpi ne, %1, %c0_i32_0 : i32
    scf.if %2 {
      %cst_17 = arith.constant 0.000000e+00 : f32
      %23 = vector.broadcast %cst_17 : f32 to vector<32x128xf32>
      %c0_18 = arith.constant 0 : index
      %c0_19 = arith.constant 0 : index
      %24 = vector.load %arg10[%c0_18, %c0_19] : memref<32x128xf32, #tpu.memory_space<vmem>>, vector<32x128xf32>
      tpu.vector_store %arg10[%c0_18, %c0_19], %23 {strides = array<i32>} : memref<32x128xf32, #tpu.memory_space<vmem>>, vector<32x128xf32>,
    } else {
    }
    %c0 = arith.constant 0 : index
    %c0_1 = arith.constant 0 : index
    %3 = vector.load %arg2[%c0, %c0_1] : memref<32x128xbf16, #tpu.memory_space<vmem>>, vector<32x128xbf16>
    %c0_2 = arith.constant 0 : index
    %c0_3 = arith.constant 0 : index
    %4 = vector.load %arg5[%c0_2, %c0_3] : memref<128x128xbf16, #tpu.memory_space<vmem>>, vector<128x128xbf16>
    %cst = arith.constant dense<0.000000e+00> : vector<32x128xf32>
    %5 = tpu.matmul %3, %4, %cst {dimension_numbers = #tpu.dot_dimension_numbers<[1], [0], [0], [1], [0, 0, 1, 1], [], []>} : vector<32x128xbf16>, vector<128x128xbf16>, vector<32x128xf32> -> vector<32x128xf32>
    %c0_4 = arith.constant 0 : index
    %c0_5 = arith.constant 0 : index
    %6 = vector.load %arg6[%c0_4, %c0_5] : memref<1x128xf32, #tpu.memory_space<vmem>>, vector<1x128xf32>
    %7 = vector.broadcast %6 : vector<1x128xf32> to vector<32x128xf32>
    %8 = arith.addf %5, %7 : vector<32x128xf32>
    %cst_6 = arith.constant 0.000000e+00 : f32
    %9 = vector.broadcast %cst_6 : f32 to vector<32x128xf32>
    %10 = arith.maximumf %8, %9 : vector<32x128xf32>
    %c0_7 = arith.constant 0 : index
    %c0_8 = arith.constant 0 : index
    %11 = vector.load %arg3[%c0_7, %c0_8] : memref<32x1xf32, #tpu.memory_space<vmem>>, vector<32x1xf32>
    %12 = vector.broadcast %11 : vector<32x1xf32> to vector<32x128xf32>
    %13 = arith.mulf %10, %12 : vector<32x128xf32>
    %c0_9 = arith.constant 0 : index
    %c0_10 = arith.constant 0 : index
    %14 = vector.load %arg10[%c0_9, %c0_10] : memref<32x128xf32, #tpu.memory_space<vmem>>, vector<32x128xf32>
    %15 = arith.truncf %13 : vector<32x128xf32> to vector<32x128xbf16>
    %c0_11 = arith.constant 0 : index
    %c0_12 = arith.constant 0 : index
    %16 = vector.load %arg7[%c0_11, %c0_12] : memref<128x128xbf16, #tpu.memory_space<vmem>>, vector<128x128xbf16>
    %cst_13 = arith.constant dense<0.000000e+00> : vector<32x128xf32>
    %17 = tpu.matmul %15, %16, %cst_13 {dimension_numbers = #tpu.dot_dimension_numbers<[1], [0], [0], [1], [0, 0, 1, 1], [], []>} : vector<32x128xbf16>, vector<128x128xbf16>, vector<32x128xf32> -> vector<32x128xf32>
    %18 = arith.addf %14, %17 : vector<32x128xf32>
    %c0_14 = arith.constant 0 : index
    %c0_15 = arith.constant 0 : index
    %19 = vector.load %arg10[%c0_14, %c0_15] : memref<32x128xf32, #tpu.memory_space<vmem>>, vector<32x128xf32>
    tpu.vector_store %arg10[%c0_14, %c0_15], %18 {strides = array<i32>} : memref<32x128xf32, #tpu.memory_space<vmem>>, vector<32x128xf32>,
    %c1_i32 = arith.constant 1 : i32
    %20 = arith.cmpi eq, %arg1, %c1_i32 : i32
    %21 = arith.extui %20 : i1 to i32
    %c0_i32_16 = arith.constant 0 : i32
    %22 = arith.cmpi ne, %21, %c0_i32_16 : i32
    scf.if %22 {
      %c0_17 = arith.constant 0 : index
      %c0_18 = arith.constant 0 : index
      %23 = vector.load %arg10[%c0_17, %c0_18] : memref<32x128xf32, #tpu.memory_space<vmem>>, vector<32x128xf32>
      %c0_19 = arith.constant 0 : index
      %c0_20 = arith.constant 0 : index
      %24 = vector.load %arg4[%c0_19, %c0_20] : memref<32x1xf32, #tpu.memory_space<vmem>>, vector<32x1xf32>
      %c0_21 = arith.constant 0 : index
      %c0_22 = arith.constant 0 : index
      %25 = vector.load %arg8[%c0_21, %c0_22] : memref<2x128xf32, #tpu.memory_space<vmem>>, vector<1x128xf32>
      %26 = vector.broadcast %24 : vector<32x1xf32> to vector<32x128xf32>
      %27 = vector.broadcast %25 : vector<1x128xf32> to vector<32x128xf32>
      %28 = arith.mulf %26, %27 : vector<32x128xf32>
      %29 = arith.addf %23, %28 : vector<32x128xf32>
      %c1 = arith.constant 1 : index
      %c0_23 = arith.constant 0 : index
      %30 = vector.load %arg8[%c1, %c0_23] : memref<2x128xf32, #tpu.memory_space<vmem>>, vector<1x128xf32>
      %31 = vector.broadcast %30 : vector<1x128xf32> to vector<32x128xf32>
      %32 = arith.addf %29, %31 : vector<32x128xf32>
      %c0_24 = arith.constant 0 : index
      %c0_25 = arith.constant 0 : index
      %33 = vector.load %arg9[%c0_24, %c0_25] : memref<32x128xf32, #tpu.memory_space<vmem>>, vector<32x128xf32>
      tpu.vector_store %arg9[%c0_24, %c0_25], %32 {strides = array<i32>} : memref<32x128xf32, #tpu.memory_space<vmem>>, vector<32x128xf32>,
    } else {
    }
    return
  }
  func.func @transform_0(%arg0: i32, %arg1: i32) -> (i32, i32) {
    %c0_i32 = arith.constant 0 : i32
    %c0_i32_0 = arith.constant 0 : i32
    return %arg0, %c0_i32 : i32, i32
  }
  func.func @transform_1(%arg0: i32, %arg1: i32) -> (i32, i32) {
    %c0_i32 = arith.constant 0 : i32
    %c0_i32_0 = arith.constant 0 : i32
    return %arg0, %c0_i32 : i32, i32
  }
  func.func @transform_2(%arg0: i32, %arg1: i32) -> (i32, i32) {
    %c0_i32 = arith.constant 0 : i32
    %c0_i32_0 = arith.constant 0 : i32
    return %arg0, %c0_i32 : i32, i32
  }
  func.func @transform_3(%arg0: i32, %arg1: i32) -> (i32, i32) {
    %c0_i32 = arith.constant 0 : i32
    %c0_i32_0 = arith.constant 0 : i32
    return %c0_i32, %arg1 : i32, i32
  }
  func.func @transform_4(%arg0: i32, %arg1: i32) -> (i32, i32) {
    %c0_i32 = arith.constant 0 : i32
    %c0_i32_0 = arith.constant 0 : i32
    return %c0_i32, %arg1 : i32, i32
  }
  func.func @transform_5(%arg0: i32, %arg1: i32) -> (i32, i32) {
    %c0_i32 = arith.constant 0 : i32
    %c0_i32_0 = arith.constant 0 : i32
    return %arg1, %c0_i32 : i32, i32
  }
  func.func @transform_6(%arg0: i32, %arg1: i32) -> (i32, i32) {
    %c0_i32 = arith.constant 0 : i32
    %c0_i32_0 = arith.constant 0 : i32
    %c0_i32_1 = arith.constant 0 : i32
    return %c0_i32, %c0_i32_0 : i32, i32
  }
  func.func @transform_7(%arg0: i32, %arg1: i32) -> (i32, i32) {
    %c0_i32 = arith.constant 0 : i32
    %c0_i32_0 = arith.constant 0 : i32
    return %arg0, %c0_i32 : i32, i32
  }
}

</mosaic_0001>

<llo_original>
// kernel: _lambda_.1
$region0: #{_lambda_.1}
  #allocation0 [shape = 'u32[]', space=smem, size = 0x4, offset = 0x4, fixed_abs, tag = 'smem constant byte address 0x4 - core index']
  #allocation1 [shape = 'u32[144,128]{1,0:T(1,128)}', space=vmem, size = 0x12000, scoped, tag = 'internal scratch']
  #allocation2 [shape = 'f32[32,128]{1,0:T(8,128)}', space=vmem, size = 0x4000, scoped, tag = 'scratch operand']
  %s0 = inlined_call_operand.vmem [shape: bf16[64,128], index: 0, kind: input, shape index: {}]
  %s1 = inlined_call_operand.vmem [shape: f32[64,1], index: 1, kind: input, shape index: {}]
  %s2 = inlined_call_operand.vmem [shape: f32[64,1], index: 2, kind: input, shape index: {}]
  %s3 = inlined_call_operand.vmem [shape: bf16[128,256], index: 3, kind: input, shape index: {}]
  %s4 = inlined_call_operand.vmem [shape: f32[1,256], index: 4, kind: input, shape index: {}]
  %s5 = inlined_call_operand.vmem [shape: bf16[256,128], index: 5, kind: input, shape index: {}]
  %s6 = inlined_call_operand.vmem [shape: f32[2,128], index: 6, kind: input, shape index: {}]
  %s7 = inlined_call_operand.hbm [shape: f32[64,128], index: 7, kind: output, shape index: {}]
  %s8 = sld [smem:[#allocation0]]
  $region110: #{_lambda_.1} parent=0
    _
  %s10 = ssub.s32 1, %s8
  %s11 = scalar_select 0, %s10, %s8
  $region1: #{_lambda_.1} parent=0
    #allocation3 [shape = 'u8[65536]{0}', space=vmem, size = 0x10000, scoped, tag = 'input window, operand 3']
    #allocation4 [shape = 'u8[32768]{0}', space=vmem, size = 0x8000, scoped, tag = 'output window, operand 0']
    #allocation5 [shape = 's32[2]{0}', space=sflag, size = 0x8, scoped, tag = 'scoped memory for _lambda_.1']
    %12 = vsyncpa [#allocation5], 0
    %s13 = scalar_lea.sflag [#allocation5], 1
    %14 = vsyncpa %s13, 0
    loop: start=0, step=1, limit=6
    $region2: #{_lambda_.1} parent=1 // loop_pre_header
      _
    $region3: #{_lambda_.1} parent=1 // loop_header
      %s16 = sphi 0, %s20
      %p17 = scmp.ge.s32.totalorder %s16, 6
      %s23 = sphi 0, %s35
      %s24 = sphi 0, %s31
      %s25 = sphi 0, %s23
      %s26 = sphi 0, %s24
      %s27 = sphi 0, %s25
      %s28 = sphi 0, %s26
      %s38 = sphi 0, %s40
      %s41 = sphi 0, %s38
      %s42 = sphi 0, %s41
      %s58 = sphi 0, %s42
      %s64 = sphi 0, %s66
      %s67 = sphi 0, %s64
      %s68 = sphi 0, %s67
      %s84 = sphi 0, %s68
      %s90 = sphi 0, %s92
      %s93 = sphi 0, %s90
      %s94 = sphi 0, %s93
      %s110 = sphi 0, %s94
      %s116 = sphi 0, %s118
      %s119 = sphi 0, %s116
      %s120 = sphi 0, %s119
      %s136 = sphi 0, %s120
      %s142 = sphi 0, %s144
      %s145 = sphi 0, %s142
      %s146 = sphi 0, %s145
      %s162 = sphi 0, %s146
      %s168 = sphi 0, %s170
      %s171 = sphi 0, %s168
      %s172 = sphi 0, %s171
      %s188 = sphi 0, %s172
      %s192 = sphi 0, %s192
      %s194 = sphi 0, %s192
      %s195 = sphi 0, %s194
      %s209 = sphi 0, %s195
      %s215 = sphi 0, %s217
      %s218 = sphi 0, %s215
      %s219 = sphi 0, %s218
      %s235 = sphi 0, %s219
    $region4: #{_lambda_.1} parent=1 // loop_header_branch
      %19 = sbr.rel (%p17) target = $region8
    $region5: #{_lambda_.1} parent=1 // loop_body
      %s21 = ssub.s32 %s16, 1
      %s22 = ssub.s32 %s16, 2
      %s29 = sadd.s32 1, %s24
      %p30 = scmp.ge.s32.totalorder %s29, 2
      %s31 = scalar_select %p30, 0, %s29
      %s32 = sadd.s32 1, %s23
      %s33 = scalar_select %p30, %s32, %s23
      %p34 = scmp.ge.s32.totalorder %s33, 2
      %s35 = scalar_select %p34, 0, %s33
      %s36 = ssub.s32 %s23, %s35
      %p37 = scmp.eq.s32.totalorder %s36, 0
      %s39 = sadd.s32 %s38, 1
      %s40 = scalar_select %p37, %s38, %s39
      %p43 = pneg %p37
      %p44 = scmp.eq.s32.totalorder %s16, 3
      %p45 = por %p43, %p44
      %p46 = scmp.ne.s32.totalorder %s38, %s41
      %p47 = scmp.eq.s32.totalorder %s16, 0
      %p48 = por %p46, %p47
      %p49 = scmp.ne.s32.totalorder %s38, %s41
      %p50 = scmp.eq.s32.totalorder %s21, 3
      %p51 = por %p49, %p50
      %p52 = scmp.ne.s32.totalorder %s41, %s42
      %p53 = scmp.eq.s32.totalorder %s21, 0
      %p54 = por %p52, %p53
      %p55 = scmp.ne.s32.totalorder %s41, %s42
      %p56 = scmp.eq.s32.totalorder %s22, 3
      %p57 = por %p55, %p56
      %p59 = scmp.ne.s32.totalorder %s42, %s58
      %p60 = scmp.eq.s32.totalorder %s22, 0
      %p61 = por %p59, %p60
      %s62 = ssub.s32 %s23, %s35
      %p63 = scmp.eq.s32.totalorder %s62, 0
      %s65 = sadd.s32 %s64, 1
      %s66 = scalar_select %p63, %s64, %s65
      %p69 = pneg %p63
      %p70 = scmp.eq.s32.totalorder %s16, 3
      %p71 = por %p69, %p70
      %p72 = scmp.ne.s32.totalorder %s64, %s67
      %p73 = scmp.eq.s32.totalorder %s16, 0
      %p74 = por %p72, %p73
      %p75 = scmp.ne.s32.totalorder %s64, %s67
      %p76 = scmp.eq.s32.totalorder %s21, 3
      %p77 = por %p75, %p76
      %p78 = scmp.ne.s32.totalorder %s67, %s68
      %p79 = scmp.eq.s32.totalorder %s21, 0
      %p80 = por %p78, %p79
      %p81 = scmp.ne.s32.totalorder %s67, %s68
      %p82 = scmp.eq.s32.totalorder %s22, 3
      %p83 = por %p81, %p82
      %p85 = scmp.ne.s32.totalorder %s68, %s84
      %p86 = scmp.eq.s32.totalorder %s22, 0
      %p87 = por %p85, %p86
      %s88 = ssub.s32 %s23, %s35
      %p89 = scmp.eq.s32.totalorder %s88, 0
      %s91 = sadd.s32 %s90, 1
      %s92 = scalar_select %p89, %s90, %s91
      %p95 = pneg %p89
      %p96 = scmp.eq.s32.totalorder %s16, 3
      %p97 = por %p95, %p96
      %p98 = scmp.ne.s32.totalorder %s90, %s93
      %p99 = scmp.eq.s32.totalorder %s16, 0
      %p100 = por %p98, %p99
      %p101 = scmp.ne.s32.totalorder %s90, %s93
      %p102 = scmp.eq.s32.totalorder %s21, 3
      %p103 = por %p101, %p102
      %p104 = scmp.ne.s32.totalorder %s93, %s94
      %p105 = scmp.eq.s32.totalorder %s21, 0
      %p106 = por %p104, %p105
      %p107 = scmp.ne.s32.totalorder %s93, %s94
      %p108 = scmp.eq.s32.totalorder %s22, 3
      %p109 = por %p107, %p108
      %p111 = scmp.ne.s32.totalorder %s94, %s110
      %p112 = scmp.eq.s32.totalorder %s22, 0
      %p113 = por %p111, %p112
      %s114 = ssub.s32 %s24, %s31
      %p115 = scmp.eq.s32.totalorder %s114, 0
      %s117 = sadd.s32 %s116, 1
      %s118 = scalar_select %p115, %s116, %s117
      %p121 = pneg %p115
      %p122 = scmp.eq.s32.totalorder %s16, 3
      %p123 = por %p121, %p122
      %p124 = scmp.ne.s32.totalorder %s116, %s119
      %p125 = scmp.eq.s32.totalorder %s16, 0
      %p126 = por %p124, %p125
      %p127 = scmp.ne.s32.totalorder %s116, %s119
      %p128 = scmp.eq.s32.totalorder %s21, 3
      %p129 = por %p127, %p128
      %p130 = scmp.ne.s32.totalorder %s119, %s120
      %p131 = scmp.eq.s32.totalorder %s21, 0
      %p132 = por %p130, %p131
      %p133 = scmp.ne.s32.totalorder %s119, %s120
      %p134 = scmp.eq.s32.totalorder %s22, 3
      %p135 = por %p133, %p134
      %p137 = scmp.ne.s32.totalorder %s120, %s136
      %p138 = scmp.eq.s32.totalorder %s22, 0
      %p139 = por %p137, %p138
      %s140 = ssub.s32 %s24, %s31
      %p141 = scmp.eq.s32.totalorder %s140, 0
      %s143 = sadd.s32 %s142, 1
      %s144 = scalar_select %p141, %s142, %s143
      %p147 = pneg %p141
      %p148 = scmp.eq.s32.totalorder %s16, 3
      %p149 = por %p147, %p148
      %p150 = scmp.ne.s32.totalorder %s142, %s145
      %p151 = scmp.eq.s32.totalorder %s16, 0
      %p152 = por %p150, %p151
      %p153 = scmp.ne.s32.totalorder %s142, %s145
      %p154 = scmp.eq.s32.totalorder %s21, 3
      %p155 = por %p153, %p154
      %p156 = scmp.ne.s32.totalorder %s145, %s146
      %p157 = scmp.eq.s32.totalorder %s21, 0
      %p158 = por %p156, %p157
      %p159 = scmp.ne.s32.totalorder %s145, %s146
      %p160 = scmp.eq.s32.totalorder %s22, 3
      %p161 = por %p159, %p160
      %p163 = scmp.ne.s32.totalorder %s146, %s162
      %p164 = scmp.eq.s32.totalorder %s22, 0
      %p165 = por %p163, %p164
      %s166 = ssub.s32 %s24, %s31
      %p167 = scmp.eq.s32.totalorder %s166, 0
      %s169 = sadd.s32 %s168, 1
      %s170 = scalar_select %p167, %s168, %s169
      %p173 = pneg %p167
      %p174 = scmp.eq.s32.totalorder %s16, 3
      %p175 = por %p173, %p174
      %p176 = scmp.ne.s32.totalorder %s168, %s171
      %p177 = scmp.eq.s32.totalorder %s16, 0
      %p178 = por %p176, %p177
      %p179 = scmp.ne.s32.totalorder %s168, %s171
      %p180 = scmp.eq.s32.totalorder %s21, 3
      %p181 = por %p179, %p180
      %p182 = scmp.ne.s32.totalorder %s171, %s172
      %p183 = scmp.eq.s32.totalorder %s21, 0
      %p184 = por %p182, %p183
      %p185 = scmp.ne.s32.totalorder %s171, %s172
      %p186 = scmp.eq.s32.totalorder %s22, 3
      %p187 = por %p185, %p186
      %p189 = scmp.ne.s32.totalorder %s172, %s188
      %p190 = scmp.eq.s32.totalorder %s22, 0
      %p191 = por %p189, %p190
      %s193 = sadd.s32 %s192, 1
      %p196 = scmp.eq.s32.totalorder %s16, 3
      %p197 = scmp.ne.s32.totalorder %s192, %s194
      %p198 = scmp.eq.s32.totalorder %s16, 0
      %p199 = por %p197, %p198
      %p200 = scmp.ne.s32.totalorder %s192, %s194
      %p201 = scmp.eq.s32.totalorder %s21, 3
      %p202 = por %p200, %p201
      %p203 = scmp.ne.s32.totalorder %s194, %s195
      %p204 = scmp.eq.s32.totalorder %s21, 0
      %p205 = por %p203, %p204
      %p206 = scmp.ne.s32.totalorder %s194, %s195
      %p207 = scmp.eq.s32.totalorder %s22, 3
      %p208 = por %p206, %p207
      %p210 = scmp.ne.s32.totalorder %s195, %s209
      %p211 = scmp.eq.s32.totalorder %s22, 0
      %p212 = por %p210, %p211
      %s213 = ssub.s32 %s23, %s35
      %p214 = scmp.eq.s32.totalorder %s213, 0
      %s216 = sadd.s32 %s215, 1
      %s217 = scalar_select %p214, %s215, %s216
      %p220 = pneg %p214
      %p221 = scmp.eq.s32.totalorder %s16, 3
      %p222 = por %p220, %p221
      %p223 = scmp.ne.s32.totalorder %s215, %s218
      %p224 = scmp.eq.s32.totalorder %s16, 0
      %p225 = por %p223, %p224
      %p226 = scmp.ne.s32.totalorder %s215, %s218
      %p227 = scmp.eq.s32.totalorder %s21, 3
      %p228 = por %p226, %p227
      %p229 = scmp.ne.s32.totalorder %s218, %s219
      %p230 = scmp.eq.s32.totalorder %s21, 0
      %p231 = por %p229, %p230
      %p232 = scmp.ne.s32.totalorder %s218, %s219
      %p233 = scmp.eq.s32.totalorder %s22, 3
      %p234 = por %p232, %p233
      %p236 = scmp.ne.s32.totalorder %s219, %s235
      %p237 = scmp.eq.s32.totalorder %s22, 0
      %p238 = por %p236, %p237
      %p239 = scmp.le.s32.totalorder 1, %s16
      %p240 = scmp.lt.s32.totalorder %s16, 5
      %p241 = pnand %p239, %p240
      %p242 = pneg %p241
      // Predicated region
      $region9: #{_lambda_.1} parent=5 // pred_check
        _
      $region10: #{_lambda_.1} parent=5 // pred_check_branch
        %244 = sbr.rel (%p241) target = $region12
      $region11: #{_lambda_.1} parent=5 // pred_region
        %s245 = ssub.s32 %s16, 1
        // Predicated region
        $region13: #{_lambda_.1} parent=11 // pred_check
          %p246 = pneg %p205
        $region14: #{_lambda_.1} parent=11 // pred_check_branch
          %248 = sbr.rel (%p246) target = $region16
        $region15: #{_lambda_.1} parent=11 // pred_region
          _
        $region16: #{_lambda_.1} parent=11 // pred_fallthru
          _
      $region12: #{_lambda_.1} parent=5 // pred_fallthru
        _
      %p249 = scmp.lt.s32.totalorder %s16, 4
      // Predicated region
      $region17: #{_lambda_.1} parent=5 // pred_check
        %p250 = pneg %p249
      $region18: #{_lambda_.1} parent=5 // pred_check_branch
        %252 = sbr.rel (%p250) target = $region20
      $region19: #{_lambda_.1} parent=5 // pred_region
        // Predicated region
        $region21: #{_lambda_.1} parent=19 // pred_check
          %p253 = pneg %p48
        $region22: #{_lambda_.1} parent=19 // pred_check_branch
          %255 = sbr.rel (%p253) target = $region24
        $region23: #{_lambda_.1} parent=19 // pred_region
          %s256 = smul.u32 4, %s23
          %p257 = scmp.lt.s32.totalorder %s256, 7
          %s258 = scalar_select %p257, %s256, 7
          %s259 = smul.addr %s258, 4
          %s260 = scalar_lea.vmem %s0, %s259
          %s261 = smul.u32 4, %s23
        $region24: #{_lambda_.1} parent=19 // pred_fallthru
          _
        // Predicated region
        $region25: #{_lambda_.1} parent=19 // pred_check
          %p262 = pneg %p74
        $region26: #{_lambda_.1} parent=19 // pred_check_branch
          %264 = sbr.rel (%p262) target = $region28
        $region27: #{_lambda_.1} parent=19 // pred_region
          %s265 = smul.u32 4, %s23
          %p266 = scmp.lt.s32.totalorder %s265, 7
          %s267 = scalar_select %p266, %s265, 7
          %s268 = smul.addr %s267, 8
          %s269 = scalar_lea.vmem %s1, %s268
          %s270 = smul.u32 4, %s23
        $region28: #{_lambda_.1} parent=19 // pred_fallthru
          _
        // Predicated region
        $region29: #{_lambda_.1} parent=19 // pred_check
          %p271 = pneg %p100
        $region30: #{_lambda_.1} parent=19 // pred_check_branch
          %273 = sbr.rel (%p271) target = $region32
        $region31: #{_lambda_.1} parent=19 // pred_region
          %s274 = smul.u32 4, %s23
          %p275 = scmp.lt.s32.totalorder %s274, 7
          %s276 = scalar_select %p275, %s274, 7
          %s277 = smul.addr %s276, 8
          %s278 = scalar_lea.vmem %s2, %s277
          %s279 = smul.u32 4, %s23
        $region32: #{_lambda_.1} parent=19 // pred_fallthru
          _
        // Predicated region
        $region33: #{_lambda_.1} parent=19 // pred_check
          %p280 = pneg %p126
        $region34: #{_lambda_.1} parent=19 // pred_check_branch
          %282 = sbr.rel (%p280) target = $region36
        $region35: #{_lambda_.1} parent=19 // pred_region
          %s283 = sand.u32 %s116, 1
          %s284 = sand.u32 %s116, 1
          %s285 = smul.addr %s284, 64
          %s286 = scalar_lea.vmem [#allocation3], %s285
          %s287 = smul.addr %s24, 4
          %s288 = scalar_lea.vmem %s3, %s287
          // Predicated region
          $region37: #{_lambda_.1} parent=35 // pred_check
            _
          $region38: #{_lambda_.1} parent=35 // pred_check_branch
            %290 = sbr.rel (0) target = $region40
          $region39: #{_lambda_.1} parent=35 // pred_region
            // Predicated region
            $region41: #{_lambda_.1} parent=39 // pred_check
              _
            $region42: #{_lambda_.1} parent=39 // pred_check_branch
              %292 = sbr.rel target = $region44
            $region43: #{_lambda_.1} parent=39 // pred_region
              // Predicated region
              $region56: #{_lambda_.1} parent=43 // pred_check
                _
              $region57: #{_lambda_.1} parent=43 // pred_check_branch
                %337 = sbr.rel (0) target = $region59
              $region58: #{_lambda_.1} parent=43 // pred_region
                loop: start=0, step=1, limit=1
                $region60: #{_lambda_.1} parent=58 // loop_pre_header
                  _
                $region61: #{_lambda_.1} parent=58 // loop_header
                  %s339 = sphi 0, %s343
                  %p340 = scmp.ge.s32.totalorder %s339, 1
                  %s344 = sphi %s288, %s288
                  %s345 = sphi %s286, %s286
                $region62: #{_lambda_.1} parent=58 // loop_header_branch
                  %342 = sbr.rel (%p340) target = $region66
                $region63: #{_lambda_.1} parent=58 // loop_body
                  _
                $region64: #{_lambda_.1} parent=58 // loop_footer
                  %s343 = sadd.s32 1, %s339
                $region65: #{_lambda_.1} parent=58 // loop_footer_branch
                  %338 = sbr.rel target = $region61
                $region66: #{_lambda_.1} parent=58 // loop_exit
                  _
                loop: start=0, step=1, limit=1
                $region67: #{_lambda_.1} parent=58 // loop_pre_header
                  _
                $region68: #{_lambda_.1} parent=58 // loop_header
                  %s348 = sphi 0, %s352
                  %p349 = scmp.ge.s32.totalorder %s348, 1
                  %s353 = sphi %s288, %s288
                  %s354 = sphi %s286, %s286
                $region69: #{_lambda_.1} parent=58 // loop_header_branch
                  %351 = sbr.rel (%p349) target = $region73
                $region70: #{_lambda_.1} parent=58 // loop_body
                  %v355 = vld [vmem:[%s353] sm:$0xf]
                  %356 = vst [vmem:[%s354] sm:$0xf] %v355
                  %v357 = vld [vmem:[%s353 + $0x8] sm:$0xf]
                  %358 = vst [vmem:[%s354 + $0x4] sm:$0xf] %v357
                  %v359 = vld [vmem:[%s353 + $0x10] sm:$0xf]
                  %360 = vst [vmem:[%s354 + $0x8] sm:$0xf] %v359
                  %v361 = vld [vmem:[%s353 + $0x18] sm:$0xf]
                  %362 = vst [vmem:[%s354 + $0xc] sm:$0xf] %v361
                  %v363 = vld [vmem:[%s353 + $0x20] sm:$0xf]
                  %364 = vst [vmem:[%s354 + $0x10] sm:$0xf] %v363
                  %v365 = vld [vmem:[%s353 + $0x28] sm:$0xf]
                  %366 = vst [vmem:[%s354 + $0x14] sm:$0xf] %v365
                  %v367 = vld [vmem:[%s353 + $0x30] sm:$0xf]
                  %368 = vst [vmem:[%s354 + $0x18] sm:$0xf] %v367
                  %v369 = vld [vmem:[%s353 + $0x38] sm:$0xf]
                  %370 = vst [vmem:[%s354 + $0x1c] sm:$0xf] %v369
                  %v371 = vld [vmem:[%s353 + $0x40] sm:$0xf]
                  %372 = vst [vmem:[%s354 + $0x20] sm:$0xf] %v371
                  %v373 = vld [vmem:[%s353 + $0x48] sm:$0xf]
                  %374 = vst [vmem:[%s354 + $0x24] sm:$0xf] %v373
                  %v375 = vld [vmem:[%s353 + $0x50] sm:$0xf]
                  %376 = vst [vmem:[%s354 + $0x28] sm:$0xf] %v375
                  %v377 = vld [vmem:[%s353 + $0x58] sm:$0xf]
                  %378 = vst [vmem:[%s354 + $0x2c] sm:$0xf] %v377
                  %v379 = vld [vmem:[%s353 + $0x60] sm:$0xf]
                  %380 = vst [vmem:[%s354 + $0x30] sm:$0xf] %v379
                  %v381 = vld [vmem:[%s353 + $0x68] sm:$0xf]
                  %382 = vst [vmem:[%s354 + $0x34] sm:$0xf] %v381
                  %v383 = vld [vmem:[%s353 + $0x70] sm:$0xf]
                  %384 = vst [vmem:[%s354 + $0x38] sm:$0xf] %v383
                  %v385 = vld [vmem:[%s353 + $0x78] sm:$0xf]
                  %386 = vst [vmem:[%s354 + $0x3c] sm:$0xf] %v385
                $region71: #{_lambda_.1} parent=58 // loop_footer
                  %s352 = sadd.s32 1, %s348
                $region72: #{_lambda_.1} parent=58 // loop_footer_branch
                  %347 = sbr.rel target = $region68
                $region73: #{_lambda_.1} parent=58 // loop_exit
                  _
              $region59: #{_lambda_.1} parent=43 // pred_fallthru
                _
            $region44: #{_lambda_.1} parent=39 // pred_fallthru
              _
            // Predicated region
            $region45: #{_lambda_.1} parent=39 // pred_check
              _
            $region46: #{_lambda_.1} parent=39 // pred_check_branch
              %294 = sbr.rel (0) target = $region48
            $region47: #{_lambda_.1} parent=39 // pred_region
              loop: start=0, step=1, limit=1
              $region49: #{_lambda_.1} parent=47 // loop_pre_header
                _
              $region50: #{_lambda_.1} parent=47 // loop_header
                %s297 = sphi 0, %s301
                %p298 = scmp.ge.s32.totalorder %s297, 1
                %s302 = sphi %s288, %s288
                %s303 = sphi %s286, %s286
              $region51: #{_lambda_.1} parent=47 // loop_header_branch
                %300 = sbr.rel (%p298) target = $region55
              $region52: #{_lambda_.1} parent=47 // loop_body
                %v304 = vld [vmem:[%s302] sm:$0xf]
                %305 = vst [vmem:[%s303] sm:$0xf] %v304
                %v306 = vld [vmem:[%s302 + $0x8] sm:$0xf]
                %307 = vst [vmem:[%s303 + $0x4] sm:$0xf] %v306
                %v308 = vld [vmem:[%s302 + $0x10] sm:$0xf]
                %309 = vst [vmem:[%s303 + $0x8] sm:$0xf] %v308
                %v310 = vld [vmem:[%s302 + $0x18] sm:$0xf]
                %311 = vst [vmem:[%s303 + $0xc] sm:$0xf] %v310
                %v312 = vld [vmem:[%s302 + $0x20] sm:$0xf]
                %313 = vst [vmem:[%s303 + $0x10] sm:$0xf] %v312
                %v314 = vld [vmem:[%s302 + $0x28] sm:$0xf]
                %315 = vst [vmem:[%s303 + $0x14] sm:$0xf] %v314
                %v316 = vld [vmem:[%s302 + $0x30] sm:$0xf]
                %317 = vst [vmem:[%s303 + $0x18] sm:$0xf] %v316
                %v318 = vld [vmem:[%s302 + $0x38] sm:$0xf]
                %319 = vst [vmem:[%s303 + $0x1c] sm:$0xf] %v318
                %v320 = vld [vmem:[%s302 + $0x40] sm:$0xf]
                %321 = vst [vmem:[%s303 + $0x20] sm:$0xf] %v320
                %v322 = vld [vmem:[%s302 + $0x48] sm:$0xf]
                %323 = vst [vmem:[%s303 + $0x24] sm:$0xf] %v322
                %v324 = vld [vmem:[%s302 + $0x50] sm:$0xf]
                %325 = vst [vmem:[%s303 + $0x28] sm:$0xf] %v324
                %v326 = vld [vmem:[%s302 + $0x58] sm:$0xf]
                %327 = vst [vmem:[%s303 + $0x2c] sm:$0xf] %v326
                %v328 = vld [vmem:[%s302 + $0x60] sm:$0xf]
                %329 = vst [vmem:[%s303 + $0x30] sm:$0xf] %v328
                %v330 = vld [vmem:[%s302 + $0x68] sm:$0xf]
                %331 = vst [vmem:[%s303 + $0x34] sm:$0xf] %v330
                %v332 = vld [vmem:[%s302 + $0x70] sm:$0xf]
                %333 = vst [vmem:[%s303 + $0x38] sm:$0xf] %v332
                %v334 = vld [vmem:[%s302 + $0x78] sm:$0xf]
                %335 = vst [vmem:[%s303 + $0x3c] sm:$0xf] %v334
              $region53: #{_lambda_.1} parent=47 // loop_footer
                %s301 = sadd.s32 1, %s297
              $region54: #{_lambda_.1} parent=47 // loop_footer_branch
                %296 = sbr.rel target = $region50
              $region55: #{_lambda_.1} parent=47 // loop_exit
                _
            $region48: #{_lambda_.1} parent=39 // pred_fallthru
              _
          $region40: #{_lambda_.1} parent=35 // pred_fallthru
            _
          %387 = vnop
        $region36: #{_lambda_.1} parent=19 // pred_fallthru
          _
        // Predicated region
        $region74: #{_lambda_.1} parent=19 // pred_check
          %p388 = pneg %p152
        $region75: #{_lambda_.1} parent=19 // pred_check_branch
          %390 = sbr.rel (%p388) target = $region77
        $region76: #{_lambda_.1} parent=19 // pred_region
          %p391 = scmp.lt.s32.totalorder %s24, 1
          %s392 = scalar_select %p391, %s24, 1
          %s393 = scalar_lea.vmem %s4, %s392
        $region77: #{_lambda_.1} parent=19 // pred_fallthru
          _
        // Predicated region
        $region78: #{_lambda_.1} parent=19 // pred_check
          %p394 = pneg %p178
        $region79: #{_lambda_.1} parent=19 // pred_check_branch
          %396 = sbr.rel (%p394) target = $region81
        $region80: #{_lambda_.1} parent=19 // pred_region
          %s397 = smul.u32 16, %s24
          %p398 = scmp.lt.s32.totalorder %s397, 31
          %s399 = scalar_select %p398, %s397, 31
          %s400 = smul.addr %s399, 4
          %s401 = scalar_lea.vmem %s5, %s400
          %s402 = smul.u32 16, %s24
        $region81: #{_lambda_.1} parent=19 // pred_fallthru
          _
      $region20: #{_lambda_.1} parent=5 // pred_fallthru
        _
      %p403 = scmp.le.s32.totalorder 1, %s16
      %p404 = scmp.lt.s32.totalorder %s16, 5
      %p405 = pnand %p403, %p404
      %p406 = pneg %p405
      // Predicated region
      $region82: #{_lambda_.1} parent=5 // pred_check
        _
      $region83: #{_lambda_.1} parent=5 // pred_check_branch
        %408 = sbr.rel (%p405) target = $region85
      $region84: #{_lambda_.1} parent=5 // pred_region
        %s409 = ssub.s32 %s16, 1
        %s410 = sand.u32 %s119, 1
        %s411 = sand.u32 %s119, 1
        %s412 = smul.addr %s411, 64
        %s413 = scalar_lea.vmem [#allocation3], %s412
        // Predicated region
        $region86: #{_lambda_.1} parent=84 // pred_check
          %p414 = pneg %p132
        $region87: #{_lambda_.1} parent=84 // pred_check_branch
          %416 = sbr.rel (%p414) target = $region89
        $region88: #{_lambda_.1} parent=84 // pred_region
          _
        $region89: #{_lambda_.1} parent=84 // pred_fallthru
          _
        %s417 = smul.u32 4, %s25
        %p418 = scmp.lt.s32.totalorder %s417, 7
        %s419 = scalar_select %p418, %s417, 7
        %s420 = smul.addr %s419, 4
        %s421 = scalar_lea.vmem %s0, %s420
        %p422 = pneg %p54
        %p423 = pneg %p51
        %s424 = smul.u32 4, %s25
        %p425 = scmp.lt.s32.totalorder %s424, 7
        %s426 = scalar_select %p425, %s424, 7
        %s427 = smul.addr %s426, 8
        %s428 = scalar_lea.vmem %s1, %s427
        %p429 = pneg %p80
        %p430 = pneg %p77
        %s431 = smul.u32 4, %s25
        %p432 = scmp.lt.s32.totalorder %s431, 7
        %s433 = scalar_select %p432, %s431, 7
        %s434 = smul.addr %s433, 8
        %s435 = scalar_lea.vmem %s2, %s434
        %p436 = pneg %p106
        %p437 = pneg %p103
        %s438 = sand.u32 %s119, 1
        %s439 = sand.u32 %s119, 1
        %s440 = smul.addr %s439, 64
        %s441 = scalar_lea.vmem [#allocation3], %s440
        %p442 = pneg %p132
        %p443 = pneg %p129
        %p444 = scmp.lt.s32.totalorder %s26, 1
        %s445 = scalar_select %p444, %s26, 1
        %s446 = scalar_lea.vmem %s4, %s445
        %p447 = pneg %p158
        %p448 = pneg %p155
        %s449 = smul.u32 16, %s26
        %p450 = scmp.lt.s32.totalorder %s449, 31
        %s451 = scalar_select %p450, %s449, 31
        %s452 = smul.addr %s451, 4
        %s453 = scalar_lea.vmem %s5, %s452
        %p454 = pneg %p184
        %p455 = pneg %p181
        %p456 = pneg %p205
        %p457 = pneg %p202
        %p458 = pneg %p231
        %p459 = pneg %p228
        %s460 = sand.u32 %s218, 1
        %s461 = scalar_lea.sflag [#allocation5], %s460
        %s462 = sand.u32 %s218, 1
        %s463 = smul.addr %s462, 32
        %s464 = scalar_lea.vmem [#allocation4], %s463
        %s465 = smul.u32 4, %s25
        %p466 = scmp.lt.s32.totalorder %s465, 7
        %s467 = scalar_select %p466, %s465, 7
        %s468 = smul.addr %s467, 4
        %s469 = scalar_lea.vmem %s0, %s468
        %s470 = smul.u32 4, %s25
        %s471 = smul.u32 4, %s25
        %p472 = scmp.lt.s32.totalorder %s471, 7
        %s473 = scalar_select %p472, %s471, 7
        %s474 = smul.addr %s473, 8
        %s475 = scalar_lea.vmem %s1, %s474
        %s476 = smul.u32 4, %s25
        %s477 = smul.u32 4, %s25
        %p478 = scmp.lt.s32.totalorder %s477, 7
        %s479 = scalar_select %p478, %s477, 7
        %s480 = smul.addr %s479, 8
        %s481 = scalar_lea.vmem %s2, %s480
        %s482 = smul.u32 4, %s25
        %p483 = scmp.lt.s32.totalorder %s26, 1
        %s484 = scalar_select %p483, %s26, 1
        %s485 = scalar_lea.vmem %s4, %s484
        %s486 = smul.u32 16, %s26
        %p487 = scmp.lt.s32.totalorder %s486, 31
        %s488 = scalar_select %p487, %s486, 31
        %s489 = smul.addr %s488, 4
        %s490 = scalar_lea.vmem %s5, %s489
        %s491 = smul.u32 16, %s26
        %s492 = smul.u32 4, %s25
        %p494 = scmp.eq.s32.totalorder %s26, 0
        // Predicated region
        $region90: #{_lambda_.1} parent=84 // pred_check
          %p495 = pneg %p494
        $region91: #{_lambda_.1} parent=84 // pred_check_branch
          %497 = sbr.rel (%p495) target = $region93
        $region92: #{_lambda_.1} parent=84 // pred_region
          %498 = vst [vmem:[#allocation2] sm:$0xff] 0.0
          %499 = vst [vmem:[#allocation2 + $0x8] sm:$0xff] 0.0
          %500 = vst [vmem:[#allocation2 + $0x10] sm:$0xff] 0.0
          %501 = vst [vmem:[#allocation2 + $0x18] sm:$0xff] 0.0
        $region93: #{_lambda_.1} parent=84 // pred_fallthru
          _
        %v502 = vld [vmem:[%s469] sm:$0xf]
        %v503 = vld [vmem:[%s469 + $0x4] sm:$0xf]
        %v504 = vld [vmem:[%s469 + $0x8] sm:$0xf]
        %v505 = vld [vmem:[%s469 + $0xc] sm:$0xf]
        %v506 = vld [vmem:[%s413] sm:$0xf]
        %v507 = vld [vmem:[%s413 + $0x4] sm:$0xf]
        %v508 = vld [vmem:[%s413 + $0x8] sm:$0xf]
        %v509 = vld [vmem:[%s413 + $0xc] sm:$0xf]
        %v510 = vld [vmem:[%s413 + $0x10] sm:$0xf]
        %v511 = vld [vmem:[%s413 + $0x14] sm:$0xf]
        %v512 = vld [vmem:[%s413 + $0x18] sm:$0xf]
        %v513 = vld [vmem:[%s413 + $0x1c] sm:$0xf]
        %v514 = vld [vmem:[%s413 + $0x20] sm:$0xf]
        %v515 = vld [vmem:[%s413 + $0x24] sm:$0xf]
        %v516 = vld [vmem:[%s413 + $0x28] sm:$0xf]
        %v517 = vld [vmem:[%s413 + $0x2c] sm:$0xf]
        %v518 = vld [vmem:[%s413 + $0x30] sm:$0xf]
        %v519 = vld [vmem:[%s413 + $0x34] sm:$0xf]
        %v520 = vld [vmem:[%s413 + $0x38] sm:$0xf]
        %v521 = vld [vmem:[%s413 + $0x3c] sm:$0xf]
        %v522 = vld [vmem:[%s485] sm:$0x1]
        %v524 = vlaneseq
        %v525 = vshrl.u32 %v524, 7
        %v526 = vsub.s32 0, %v525
        %v527 = vrot.slane %v522, %v526
        %v533 = vunpack.c.l.b16 %v502
        %v534 = vunpack.c.l.b16 %v503
        %v535 = vunpack.c.l.b16 %v504
        %v536 = vunpack.c.l.b16 %v505
        %v537 = vpack.c.b16 %v534, %v533
        %v538 = vpack.c.b16 %v536, %v535
        %v557 = vunpack.c.l.b16 %v506
        %v558 = vunpack.c.l.b16 %v507
        %v559 = vunpack.c.l.b16 %v508
        %v560 = vunpack.c.l.b16 %v509
        %v561 = vunpack.c.l.b16 %v510
        %v562 = vunpack.c.l.b16 %v511
        %v563 = vunpack.c.l.b16 %v512
        %v564 = vunpack.c.l.b16 %v513
        %v565 = vunpack.c.l.b16 %v514
        %v566 = vunpack.c.l.b16 %v515
        %v567 = vunpack.c.l.b16 %v516
        %v568 = vunpack.c.l.b16 %v517
        %v569 = vunpack.c.l.b16 %v518
        %v570 = vunpack.c.l.b16 %v519
        %v571 = vunpack.c.l.b16 %v520
        %v572 = vunpack.c.l.b16 %v521
        %v573 = vpack.c.b16 %v558, %v557
        %v574 = vpack.c.b16 %v560, %v559
        %v575 = vpack.c.b16 %v562, %v561
        %v576 = vpack.c.b16 %v564, %v563
        %v577 = vpack.c.b16 %v566, %v565
        %v578 = vpack.c.b16 %v568, %v567
        %v579 = vpack.c.b16 %v570, %v569
        %v580 = vpack.c.b16 %v572, %v571
        %589 = vmatprep.subr.bf16.mxu0 0
        %590 = vmatpush1.bf16.msra.mxu0 %v573
        %591 = vmatprep.subr.bf16.mxu0 0
        %592 = vmatpush1.bf16.msra.mxu0 %v574
        %593 = vmatprep.subr.bf16.mxu0 0
        %594 = vmatpush1.bf16.msra.mxu0 %v575
        %595 = vmatprep.subr.bf16.mxu0 0
        %596 = vmatpush1.bf16.msra.mxu0 %v576
        %597 = vmatprep.subr.bf16.mxu0 0
        %598 = vmatpush1.bf16.msra.mxu0 %v577
        %599 = vmatprep.subr.bf16.mxu0 0
        %600 = vmatpush1.bf16.msra.mxu0 %v578
        %601 = vmatprep.subr.bf16.mxu0 0
        %602 = vmatpush1.bf16.msra.mxu0 %v579
        %603 = vmatprep.subr.bf16.mxu0 0
        %604 = vmatpush1.bf16.msra.mxu0 %v580
        %605 = vmatprep.subr.bf16.mxu0 0
        %606 = vmatpush1.bf16.msra.mxu0 0
        %607 = vmatprep.subr.bf16.mxu0 0
        %608 = vmatpush1.bf16.msra.mxu0 0
        %609 = vmatprep.subr.bf16.mxu0 0
        %610 = vmatpush1.bf16.msra.mxu0 0
        %611 = vmatprep.subr.bf16.mxu0 0
        %612 = vmatpush1.bf16.msra.mxu0 0
        %613 = vmatprep.subr.bf16.mxu0 0
        %614 = vmatpush1.bf16.msra.mxu0 0
        %615 = vmatprep.subr.bf16.mxu0 0
        %616 = vmatpush1.bf16.msra.mxu0 0
        %617 = vmatprep.subr.bf16.mxu0 0
        %618 = vmatpush1.bf16.msra.mxu0 0
        %619 = vmatprep.subr.bf16.mxu0 0
        %620 = vmatpush1.bf16.msra.mxu0 0
        %621 = vmatprep.mubr.bf16.mxu0 0
        %622 = vmatmul.mubr.bf16.gmra.mrb[0].mxu0 %v537
        %v623 = vpop.f32.mrb[0].mxu0
        %v624 = vadd.f32 %v527, %v623
        %v625 = vpop.f32.mrb[0].mxu0
        %v626 = vpop.f32.mrb[0].mxu0
        %v627 = vadd.f32 %v527, %v626
        %v628 = vpop.f32.mrb[0].mxu0
        %629 = vmatprep.mubr.bf16.mxu0 0
        %630 = vmatmul.mubr.bf16.gmra.mrb[0].mxu0 %v538
        %v631 = vpop.f32.mrb[0].mxu0
        %v632 = vadd.f32 %v527, %v631
        %v633 = vpop.f32.mrb[0].mxu0
        %v634 = vpop.f32.mrb[0].mxu0
        %v635 = vadd.f32 %v527, %v634
        %v636 = vpop.f32.mrb[0].mxu0
        %637 = vdwg.mxu0
        %v638 = vmax.f32 %v624, 0.0
        %v639 = vmax.f32 %v627, 0.0
        %v640 = vmax.f32 %v632, 0.0
        %v641 = vmax.f32 %v635, 0.0
        %v642 = vld [vmem:[%s475] sm:$0xff]
        %v643 = vld [vmem:[%s475 + $0x8] sm:$0xff]
        %v644 = vld [vmem:[%s475 + $0x10] sm:$0xff]
        %v645 = vld [vmem:[%s475 + $0x18] sm:$0xff]
        %647 = vset.pattern.permute.xlu0 0
        %648 = vperm.xlu0 %647, %v642
        %v649 = vpop.permute.xlu0 %648
        %652 = vset.pattern.permute.xlu0 0
        %653 = vperm.xlu0 %652, %v643
        %v654 = vpop.permute.xlu0 %653
        %657 = vset.pattern.permute.xlu0 0
        %658 = vperm.xlu0 %657, %v644
        %v659 = vpop.permute.xlu0 %658
        %662 = vset.pattern.permute.xlu0 0
        %663 = vperm.xlu0 %662, %v645
        %v664 = vpop.permute.xlu0 %663
        %v666 = vmul.f32 %v638, %v649
        %v667 = vmul.f32 %v639, %v654
        %v668 = vmul.f32 %v640, %v659
        %v669 = vmul.f32 %v641, %v664
        %v670 = vld [vmem:[#allocation2] sm:$0xff]
        %v671 = vld [vmem:[#allocation2 + $0x8] sm:$0xff]
        %v672 = vld [vmem:[#allocation2 + $0x10] sm:$0xff]
        %v673 = vld [vmem:[#allocation2 + $0x18] sm:$0xff]
        %v674 = vpack.c.bf16 %v667, %v666
        %v675 = vpack.c.bf16 %v669, %v668
        %v676 = vld [vmem:[%s490] sm:$0xf]
        %v677 = vld [vmem:[%s490 + $0x4] sm:$0xf]
        %v678 = vld [vmem:[%s490 + $0x8] sm:$0xf]
        %v679 = vld [vmem:[%s490 + $0xc] sm:$0xf]
        %v680 = vld [vmem:[%s490 + $0x10] sm:$0xf]
        %v681 = vld [vmem:[%s490 + $0x14] sm:$0xf]
        %v682 = vld [vmem:[%s490 + $0x18] sm:$0xf]
        %v683 = vld [vmem:[%s490 + $0x1c] sm:$0xf]
        %v684 = vld [vmem:[%s490 + $0x20] sm:$0xf]
        %v685 = vld [vmem:[%s490 + $0x24] sm:$0xf]
        %v686 = vld [vmem:[%s490 + $0x28] sm:$0xf]
        %v687 = vld [vmem:[%s490 + $0x2c] sm:$0xf]
        %v688 = vld [vmem:[%s490 + $0x30] sm:$0xf]
        %v689 = vld [vmem:[%s490 + $0x34] sm:$0xf]
        %v690 = vld [vmem:[%s490 + $0x38] sm:$0xf]
        %v691 = vld [vmem:[%s490 + $0x3c] sm:$0xf]
        %v708 = vunpack.c.l.b16 %v676
        %v709 = vunpack.c.l.b16 %v677
        %v710 = vunpack.c.l.b16 %v678
        %v711 = vunpack.c.l.b16 %v679
        %v712 = vunpack.c.l.b16 %v680
        %v713 = vunpack.c.l.b16 %v681
        %v714 = vunpack.c.l.b16 %v682
        %v715 = vunpack.c.l.b16 %v683
        %v716 = vunpack.c.l.b16 %v684
        %v717 = vunpack.c.l.b16 %v685
        %v718 = vunpack.c.l.b16 %v686
        %v719 = vunpack.c.l.b16 %v687
        %v720 = vunpack.c.l.b16 %v688
        %v721 = vunpack.c.l.b16 %v689
        %v722 = vunpack.c.l.b16 %v690
        %v723 = vunpack.c.l.b16 %v691
        %v724 = vpack.c.b16 %v709, %v708
        %v725 = vpack.c.b16 %v711, %v710
        %v726 = vpack.c.b16 %v713, %v712
        %v727 = vpack.c.b16 %v715, %v714
        %v728 = vpack.c.b16 %v717, %v716
        %v729 = vpack.c.b16 %v719, %v718
        %v730 = vpack.c.b16 %v721, %v720
        %v731 = vpack.c.b16 %v723, %v722
        %740 = vmatprep.subr.bf16.mxu0 0
        %741 = vmatpush1.bf16.msra.mxu0 %v724
        %742 = vmatprep.subr.bf16.mxu0 0
        %743 = vmatpush1.bf16.msra.mxu0 %v725
        %744 = vmatprep.subr.bf16.mxu0 0
        %745 = vmatpush1.bf16.msra.mxu0 %v726
        %746 = vmatprep.subr.bf16.mxu0 0
        %747 = vmatpush1.bf16.msra.mxu0 %v727
        %748 = vmatprep.subr.bf16.mxu0 0
        %749 = vmatpush1.bf16.msra.mxu0 %v728
        %750 = vmatprep.subr.bf16.mxu0 0
        %751 = vmatpush1.bf16.msra.mxu0 %v729
        %752 = vmatprep.subr.bf16.mxu0 0
        %753 = vmatpush1.bf16.msra.mxu0 %v730
        %754 = vmatprep.subr.bf16.mxu0 0
        %755 = vmatpush1.bf16.msra.mxu0 %v731
        %756 = vmatprep.subr.bf16.mxu0 0
        %757 = vmatpush1.bf16.msra.mxu0 0
        %758 = vmatprep.subr.bf16.mxu0 0
        %759 = vmatpush1.bf16.msra.mxu0 0
        %760 = vmatprep.subr.bf16.mxu0 0
        %761 = vmatpush1.bf16.msra.mxu0 0
        %762 = vmatprep.subr.bf16.mxu0 0
        %763 = vmatpush1.bf16.msra.mxu0 0
        %764 = vmatprep.subr.bf16.mxu0 0
        %765 = vmatpush1.bf16.msra.mxu0 0
        %766 = vmatprep.subr.bf16.mxu0 0
        %767 = vmatpush1.bf16.msra.mxu0 0
        %768 = vmatprep.subr.bf16.mxu0 0
        %769 = vmatpush1.bf16.msra.mxu0 0
        %770 = vmatprep.subr.bf16.mxu0 0
        %771 = vmatpush1.bf16.msra.mxu0 0
        %772 = vmatprep.mubr.bf16.mxu0 0
        %773 = vmatmul.mubr.bf16.gmra.mrb[0].mxu0 %v674
        %v774 = vpop.f32.mrb[0].mxu0
        %v775 = vadd.f32 0.0, %v774
        %v776 = vpop.f32.mrb[0].mxu0
        %v777 = vpop.f32.mrb[0].mxu0
        %v778 = vadd.f32 0.0, %v777
        %v779 = vpop.f32.mrb[0].mxu0
        %780 = vmatprep.mubr.bf16.mxu0 0
        %781 = vmatmul.mubr.bf16.gmra.mrb[0].mxu0 %v675
        %v782 = vpop.f32.mrb[0].mxu0
        %v783 = vadd.f32 0.0, %v782
        %v784 = vpop.f32.mrb[0].mxu0
        %v785 = vpop.f32.mrb[0].mxu0
        %v786 = vadd.f32 0.0, %v785
        %v787 = vpop.f32.mrb[0].mxu0
        %788 = vdwg.mxu0
        %v789 = vadd.f32 %v670, %v775
        %v790 = vadd.f32 %v671, %v778
        %v791 = vadd.f32 %v672, %v783
        %v792 = vadd.f32 %v673, %v786
        %793 = vst [vmem:[#allocation2] sm:$0xff] %v789
        %794 = vst [vmem:[#allocation2 + $0x8] sm:$0xff] %v790
        %795 = vst [vmem:[#allocation2 + $0x10] sm:$0xff] %v791
        %796 = vst [vmem:[#allocation2 + $0x18] sm:$0xff] %v792
        %p797 = scmp.eq.s32.totalorder %s26, 1
        // Predicated region
        $region94: #{_lambda_.1} parent=84 // pred_check
          %p798 = pneg %p797
        $region95: #{_lambda_.1} parent=84 // pred_check_branch
          %800 = sbr.rel (%p798) target = $region97
        $region96: #{_lambda_.1} parent=84 // pred_region
          %v801 = vld [vmem:[#allocation2] sm:$0xff]
          %v802 = vld [vmem:[#allocation2 + $0x8] sm:$0xff]
          %v803 = vld [vmem:[#allocation2 + $0x10] sm:$0xff]
          %v804 = vld [vmem:[#allocation2 + $0x18] sm:$0xff]
          %v805 = vld [vmem:[%s481] sm:$0xff]
          %v806 = vld [vmem:[%s481 + $0x8] sm:$0xff]
          %v807 = vld [vmem:[%s481 + $0x10] sm:$0xff]
          %v808 = vld [vmem:[%s481 + $0x18] sm:$0xff]
          %v809 = vld [vmem:[%s6] sm:$0x1]
          %811 = vset.pattern.permute.xlu0 0
          %812 = vperm.xlu0 %811, %v805
          %v813 = vpop.permute.xlu0 %812
          %816 = vset.pattern.permute.xlu0 0
          %817 = vperm.xlu0 %816, %v806
          %v818 = vpop.permute.xlu0 %817
          %821 = vset.pattern.permute.xlu0 0
          %822 = vperm.xlu0 %821, %v807
          %v823 = vpop.permute.xlu0 %822
          %826 = vset.pattern.permute.xlu0 0
          %827 = vperm.xlu0 %826, %v808
          %v828 = vpop.permute.xlu0 %827
          %v830 = vlaneseq
          %v831 = vshrl.u32 %v830, 7
          %v832 = vsub.s32 0, %v831
          %v833 = vrot.slane %v809, %v832
          %v834 = vmul.f32 %v813, %v833
          %v835 = vmul.f32 %v818, %v833
          %v836 = vmul.f32 %v823, %v833
          %v837 = vmul.f32 %v828, %v833
          %v838 = vadd.f32 %v801, %v834
          %v839 = vadd.f32 %v802, %v835
          %v840 = vadd.f32 %v803, %v836
          %v841 = vadd.f32 %v804, %v837
          %v842 = vld [vmem:[%s6 + $0x1] sm:$0x1]
          %v843 = vlaneseq
          %v844 = vshrl.u32 %v843, 7
          %v845 = vsub.s32 0, %v844
          %v846 = vrot.slane %v842, %v845
          %v847 = vadd.f32 %v838, %v846
          %v848 = vadd.f32 %v839, %v846
          %v849 = vadd.f32 %v840, %v846
          %v850 = vadd.f32 %v841, %v846
          %851 = vst [vmem:[%s464] sm:$0xff] %v847
          %852 = vst [vmem:[%s464 + $0x8] sm:$0xff] %v848
          %853 = vst [vmem:[%s464 + $0x10] sm:$0xff] %v849
          %854 = vst [vmem:[%s464 + $0x18] sm:$0xff] %v850
        $region97: #{_lambda_.1} parent=84 // pred_fallthru
          _
        %s855 = sand.u32 %s218, 1
        %s856 = scalar_lea.sflag [#allocation5], %s855
        %s857 = sand.u32 %s218, 1
        %s858 = smul.addr %s857, 32
        %s859 = scalar_lea.vmem [#allocation4], %s858
        // Predicated region
        $region98: #{_lambda_.1} parent=84 // pred_check
          %p860 = pneg %p228
        $region99: #{_lambda_.1} parent=84 // pred_check_branch
          %862 = sbr.rel (%p860) target = $region101
        $region100: #{_lambda_.1} parent=84 // pred_region
          %s863 = smul.u32 4, %s25
          %s865 = ssub.s32 512, 512
          %866 = vsyncadd %s856, %s865
          %s867 = smul.addr %s863, 128
          %s868 = scalar_lea.hbm %s7, %s867
          %s869 = sshll.u32 %s859, 4
          %s870 = int_to_ptr.vmem [resolvable:$true] %s869
          %875 = dma.vmem_to_hbm [thread:$0]  %s870, 512, %s868, %s856, 128, 128, 8
        $region101: #{_lambda_.1} parent=84 // pred_fallthru
          _
      $region85: #{_lambda_.1} parent=5 // pred_fallthru
        _
      %p876 = scmp.le.s32.totalorder 2, %s16
      // Predicated region
      $region102: #{_lambda_.1} parent=5 // pred_check
        %p877 = pneg %p876
      $region103: #{_lambda_.1} parent=5 // pred_check_branch
        %879 = sbr.rel (%p877) target = $region105
      $region104: #{_lambda_.1} parent=5 // pred_region
        %s880 = ssub.s32 %s16, 2
        // Predicated region
        $region106: #{_lambda_.1} parent=104 // pred_check
          %p881 = pneg %p234
        $region107: #{_lambda_.1} parent=104 // pred_check_branch
          %883 = sbr.rel (%p881) target = $region109
        $region108: #{_lambda_.1} parent=104 // pred_region
          %s884 = sand.u32 %s219, 1
          %s885 = scalar_lea.sflag [#allocation5], %s884
          %s886 = sand.u32 %s219, 1
          %s887 = smul.addr %s886, 32
          %s888 = scalar_lea.vmem [#allocation4], %s887
          %889 = dma.done %s885, 512
        $region109: #{_lambda_.1} parent=104 // pred_fallthru
          _
      $region105: #{_lambda_.1} parent=5 // pred_fallthru
        _
    $region6: #{_lambda_.1} parent=1 // loop_footer
      %s20 = sadd.s32 1, %s16
    $region7: #{_lambda_.1} parent=1 // loop_footer_branch
      %15 = sbr.rel target = $region3
    $region8: #{_lambda_.1} parent=1 // loop_exit
      _
    %890 = vsyncpa [#allocation5], 1
    %s891 = scalar_lea.sflag [#allocation5], 1
    %892 = vsyncpa %s891, 1

</llo_original>
